<compile_context>
chip_gen: v7x
topology: tpu7x:2x2x1
jax: 0.10.0
libtpu: 0.0.40
codegen_flags: <defaults>
</compile_context>

<pallas_src>
import functools

import jax
import jax.numpy as jnp
from jax.experimental import pallas as pl
from jax.experimental.pallas import tpu as pltpu


# --------------------------------------------------------------------------- #
# Kernels
# --------------------------------------------------------------------------- #

def _bn_fused_kernel(x_ref, gb_ref, o_ref, stats_ref, *, inv_count, eps):
    """Single-pass BN: stats + normalize on one resident (N, tc, L) slab.

    x_ref:     (N, tc, L)  full batch for this channel tile.
    gb_ref:    (tc, 2)     [:, 0] = gain, [:, 1] = bias.
    o_ref:     (N, tc, L)  normalized output.
    stats_ref: (tc, 2)     [:, 0] = batch mean, [:, 1] = biased batch var.
    """
    x = x_ref[...].astype(jnp.float32)
    # Per-channel mean over (batch, spatial): lane reduce, then leading-axis reduce.
    s = jnp.sum(jnp.sum(x, axis=2, keepdims=True), axis=0, keepdims=True)
    mean = s * inv_count                                             # (1, tc, 1)
    xc = x - mean
    ss = jnp.sum(jnp.sum(xc * xc, axis=2, keepdims=True), axis=0, keepdims=True)
    var = ss * inv_count                                             # (1, tc, 1)
    inv_std = jax.lax.rsqrt(var + eps)

    gb = gb_ref[...].astype(jnp.float32)                             # (tc, 2)
    gain = gb[:, 0:1]                                                # (tc, 1)
    bias = gb[:, 1:2]
    o_ref[...] = (xc * (gain * inv_std) + bias).astype(o_ref.dtype)
    stats_ref[...] = jnp.concatenate([mean[0], var[0]], axis=-1)     # (tc, 2)


def _bn_stats_kernel(x_ref, stats_ref, *, inv_count):
    """Fallback pass 1: accumulate per-channel sum / sum(x^2) over batch blocks.

    x_ref:     (nb, tc, L)  one batch slice of a channel tile.
    stats_ref: (tc, 2)      resident accumulator; finalized to (mean, var).
    """
    n = pl.program_id(1)

    @pl.when(n == 0)
    def _init():
        stats_ref[...] = jnp.zeros_like(stats_ref)

    x = x_ref[...].astype(jnp.float32)
    s = jnp.sum(jnp.sum(x, axis=2, keepdims=True), axis=0)           # (tc, 1)
    ss = jnp.sum(jnp.sum(x * x, axis=2, keepdims=True), axis=0)      # (tc, 1)
    stats_ref[...] += jnp.concatenate([s, ss], axis=-1)

    @pl.when(n == pl.num_programs(1) - 1)
    def _finalize():
        acc = stats_ref[...]
        mean = acc[:, 0:1] * inv_count
        ex2 = acc[:, 1:2] * inv_count
        # TODO(synk): E[x^2]-mean^2 can cancel when |mean| >> std; a shifted /
        # Welford accumulation would be more robust on this rare fallback path.
        var = jnp.maximum(ex2 - mean * mean, 0.0)
        stats_ref[...] = jnp.concatenate([mean, var], axis=-1)


def _bn_apply_kernel(x_ref, ss_ref, o_ref):
    """Fallback pass 2: out = x * scale + shift (per-channel fused FMA).

    ss_ref: (tc, 2) with [:, 0] = scale, [:, 1] = shift.
    """
    x = x_ref[...].astype(jnp.float32)
    ss = ss_ref[...]
    o_ref[...] = (x * ss[:, 0:1] + ss[:, 1:2]).astype(o_ref.dtype)


# --------------------------------------------------------------------------- #
# Tiling helpers
# --------------------------------------------------------------------------- #

def _vmem_capacity_bytes():
    """Physical VMEM per core; conservative 64 MiB (v7x) if the query fails."""
    try:
        cap = int(pltpu.get_tpu_info().vmem_capacity_bytes)
        if cap > 0:
            return cap
    except Exception:
        pass
    return 64 << 20


def _valid_c_tiles(C, step):
    """Channel tile sizes satisfying the sublane rule (multiple of step or full C)
    that divide C evenly (so no padded garbage enters the statistics)."""
    tiles = {C}
    t = step
    while t < C:
        if C % t == 0:
            tiles.add(t)
        t += step
    # TODO(synk): awkward C with no step-aligned divisor falls back to tc=C.
    return sorted(tiles)


def _pick_fused_tc(C, per_c_bytes, step, target_bytes):
    """Largest channel tile whose full-batch slab fits VMEM budget; None if none.
    Prefers >= 2 tiles so both v7x TensorCores get work on the parallel axis."""
    tiles = _valid_c_tiles(C, step)
    fitting = [t for t in tiles if t * per_c_bytes <= target_bytes]
    if not fitting:
        return None
    tc = max(fitting)
    if tc == C and C * per_c_bytes > (2 << 20):
        smaller = [t for t in fitting if t <= C // 2]
        if smaller:
            tc = max(smaller)
    return tc


def _pick_pass_tiles(C, N, per_c_bytes, step, target_bytes):
    """(tc, nb) for the two-pass fallback. per_c_bytes = L * itemsize."""
    tiles = _valid_c_tiles(C, step)
    fitting = [t for t in tiles if t * per_c_bytes <= target_bytes]
    if not fitting:
        return min(tiles), 1
    tc = max(fitting)
    if tc == C:
        smaller = [t for t in fitting if t <= C // 2]
        if smaller:                       # keep both TensorCores busy
            return max(smaller), 1
        nb = 1                            # C cannot split: grow the batch dim
        for cand in range(1, N + 1):
            if N % cand == 0 and cand * C * per_c_bytes <= target_bytes:
                nb = cand
        return C, nb
    return tc, 1


# --------------------------------------------------------------------------- #
# Forward wrapper (training-mode batch norm, matching the PyTorch module)
# --------------------------------------------------------------------------- #

def bn_forward(x_nchw, gain, bias, stored_mean, stored_var,
               eps=1e-5, momentum=0.1):
    """Training-mode batch norm matching the PyTorch `bn` module forward.

    Returns (out, new_stored_mean, new_stored_var)."""
    N, C, H, W = x_nchw.shape
    L = H * W
    count = N * L
    itemsize = jnp.dtype(x_nchw.dtype).itemsize

    # Free contiguous view: NCHW -> (N, C, H*W). No HBM transpose traffic.
    x3d = x_nchw.reshape(N, C, L)

    gain_f = gain.astype(jnp.float32).reshape(C)
    bias_f = bias.astype(jnp.float32).reshape(C)

    # Generation-aware budgets: large blocks on 128 MiB-VMEM parts (v5e/v6e),
    # safe on v7x's 64 MiB. Budgets leave room for double-buffered in/out blocks
    # plus f32 compute temporaries.
    vmem_cap = _vmem_capacity_bytes()
    vmem_limit = min((vmem_cap * 3) // 4, 100 << 20)
    fused_target = vmem_limit // 12        # input-slab budget for the fused path
    pass_target = vmem_limit // 8          # per-pass x-block budget (fallback)
    step = 8 * max(1, 4 // itemsize)       # dtype-aware sublane packing (8/16/32)

    tc = _pick_fused_tc(C, N * L * itemsize, step, fused_target)

    if tc is not None:
        # ------------- Fused single pass: stats + normalize (2x|x| HBM) ------
        num_c = C // tc
        gb = jnp.stack([gain_f, bias_f], axis=-1)                    # (C, 2)
        out3d, stats = pl.pallas_call(
            functools.partial(_bn_fused_kernel,
                              inv_count=1.0 / count, eps=eps),
            out_shape=(jax.ShapeDtypeStruct((N, C, L), x_nchw.dtype),
                       jax.ShapeDtypeStruct((C, 2), jnp.float32)),
            grid=(num_c,),
            in_specs=[pl.BlockSpec((N, tc, L), lambda c: (0, c, 0)),
                      pl.BlockSpec((tc, 2), lambda c: (c, 0))],
            out_specs=(pl.BlockSpec((N, tc, L), lambda c: (0, c, 0)),
                       pl.BlockSpec((tc, 2), lambda c: (c, 0))),
            compiler_params=pltpu.CompilerParams(
                dimension_semantics=("parallel",),
                vmem_limit_bytes=vmem_limit),
        )(x3d, gb)
        mean = stats[:, 0]
        var_b = stats[:, 1]
    else:
        # ------------- Two-pass fallback (very large per-channel slabs) ------
        tc, nb = _pick_pass_tiles(C, N, L * itemsize, step, pass_target)
        num_c, num_n = C // tc, N // nb

        stats = pl.pallas_call(
            functools.partial(_bn_stats_kernel, inv_count=1.0 / count),
            out_shape=jax.ShapeDtypeStruct((C, 2), jnp.float32),
            grid=(num_c, num_n),
            in_specs=[pl.BlockSpec((nb, tc, L), lambda c, n: (n, c, 0))],
            out_specs=pl.BlockSpec((tc, 2), lambda c, n: (c, 0)),
            compiler_params=pltpu.CompilerParams(
                dimension_semantics=("parallel", "arbitrary"),
                vmem_limit_bytes=vmem_limit),
        )(x3d)
        mean = stats[:, 0]
        var_b = stats[:, 1]

        # Tiny C-sized glue: fold gain/bias/eps into a single per-channel FMA.
        inv_std = jax.lax.rsqrt(var_b + eps)
        scale = gain_f * inv_std
        shift = bias_f - mean * scale
        ss = jnp.stack([scale, shift], axis=-1)                      # (C, 2)

        out3d = pl.pallas_call(
            _bn_apply_kernel,
            out_shape=jax.ShapeDtypeStruct((N, C, L), x_nchw.dtype),
            grid=(num_c, num_n),
            in_specs=[pl.BlockSpec((nb, tc, L), lambda c, n: (n, c, 0)),
                      pl.BlockSpec((tc, 2), lambda c, n: (c, 0))],
            out_specs=pl.BlockSpec((nb, tc, L), lambda c, n: (n, c, 0)),
            compiler_params=pltpu.CompilerParams(
                dimension_semantics=("parallel", "parallel"),
                vmem_limit_bytes=vmem_limit),
        )(x3d, ss)

    out = out3d.reshape(N, C, H, W)

    # Running-buffer update (PyTorch side effect), reusing the kernel's stats.
    # TODO(synk): count == 1 is guarded here; PyTorch would emit inf/NaN
    # unbiased variance in that degenerate case.
    bessel = count / max(count - 1, 1)
    var_unbiased = var_b * bessel
    new_mean = (1.0 - momentum) * stored_mean + momentum * mean
    new_var = (1.0 - momentum) * stored_var + momentum * var_unbiased
    return out, new_mean, new_var


if __name__ == "__main__":
    key = jax.random.PRNGKey(0)
    N, C, H, W = 2, 4, 16, 16
    x = jax.random.normal(key, (N, C, H, W), dtype=jnp.float32)

    # Deterministic parameter init, matching the module's __init__:
    gain = jnp.ones((C,), jnp.float32)          # self.gain
    bias = jnp.zeros((C,), jnp.float32)         # self.bias
    stored_mean = jnp.zeros((C,), jnp.float32)  # running buffer
    stored_var = jnp.ones((C,), jnp.float32)    # running buffer

    out, new_mean, new_var = bn_forward(x, gain, bias, stored_mean, stored_var)
    jax.block_until_ready((out, new_mean, new_var))

    # Pure-JAX reference of training-mode batch norm.
    mean_ref = jnp.mean(x, axis=(0, 2, 3), keepdims=True)
    var_ref = jnp.mean((x - mean_ref) ** 2, axis=(0, 2, 3), keepdims=True)
    ref = (x - mean_ref) * jax.lax.rsqrt(var_ref + 1e-5)
    ref = ref * gain.reshape(1, C, 1, 1) + bias.reshape(1, C, 1, 1)
    assert jnp.allclose(out, ref, atol=1e-4, rtol=1e-4)

    # Running-buffer reference (unbiased batch variance, momentum update).
    cnt = N * H * W
    var_ub = var_ref.reshape(C) * (cnt / (cnt - 1))
    assert jnp.allclose(new_mean, 0.1 * mean_ref.reshape(C), atol=1e-5)
    assert jnp.allclose(new_var, 0.9 * jnp.ones(C) + 0.1 * var_ub,
                        atol=1e-5, rtol=1e-5)

    print("KERNEL_OK")
</pallas_src>

<mosaic_0001>
module attributes {stable_mosaic.version = 11 : i64} {
  func.func @_bn_fused_kernel(%arg0: i32, %arg1: memref<2x4x256xf32, #tpu.memory_space<vmem>>, %arg2: memref<4x2xf32, #tpu.memory_space<vmem>>, %arg3: memref<2x4x256xf32, #tpu.memory_space<vmem>>, %arg4: memref<4x2xf32, #tpu.memory_space<vmem>>) attributes {dimension_semantics = [#tpu.dimension_semantics<parallel>], iteration_bounds = array<i64: 1>, scalar_prefetch = 0 : i64, scratch_operands = 0 : i64, tpu.core_type = #tpu.core_type<tc>, window_params = [{transform_indices = @transform_0, window_bounds = array<i64: 2, 4, 256>}, {transform_indices = @transform_1, window_bounds = array<i64: 4, 2>}, {transform_indices = @transform_2, window_bounds = array<i64: 2, 4, 256>}, {transform_indices = @transform_3, window_bounds = array<i64: 4, 2>}]} {
    %c0 = arith.constant 0 : index
    %c0_0 = arith.constant 0 : index
    %c0_1 = arith.constant 0 : index
    %0 = vector.load %arg1[%c0, %c0_0, %c0_1] : memref<2x4x256xf32, #tpu.memory_space<vmem>>, vector<2x4x256xf32>
    %cst = arith.constant dense<0.000000e+00> : vector<2x4xf32>
    %1 = vector.multi_reduction <add>, %0, %cst [2] : vector<2x4x256xf32> to vector<2x4xf32>
    %2 = vector.shape_cast %1 : vector<2x4xf32> to vector<2x4x1xf32>
    %cst_2 = arith.constant dense<0.000000e+00> : vector<4x1xf32>
    %3 = vector.multi_reduction <add>, %2, %cst_2 [0] : vector<2x4x1xf32> to vector<4x1xf32>
    %4 = vector.shape_cast %3 : vector<4x1xf32> to vector<1x4x1xf32>
    %cst_3 = arith.constant 0.001953125 : f32
    %5 = vector.broadcast %cst_3 : f32 to vector<1x4x1xf32>
    %6 = arith.mulf %4, %5 : vector<1x4x1xf32>
    %7 = vector.broadcast %6 : vector<1x4x1xf32> to vector<2x4x256xf32>
    %8 = arith.subf %0, %7 : vector<2x4x256xf32>
    %9 = arith.mulf %8, %8 : vector<2x4x256xf32>
    %cst_4 = arith.constant dense<0.000000e+00> : vector<2x4xf32>
    %10 = vector.multi_reduction <add>, %9, %cst_4 [2] : vector<2x4x256xf32> to vector<2x4xf32>
    %11 = vector.shape_cast %10 : vector<2x4xf32> to vector<2x4x1xf32>
    %cst_5 = arith.constant dense<0.000000e+00> : vector<4x1xf32>
    %12 = vector.multi_reduction <add>, %11, %cst_5 [0] : vector<2x4x1xf32> to vector<4x1xf32>
    %13 = vector.shape_cast %12 : vector<4x1xf32> to vector<1x4x1xf32>
    %cst_6 = arith.constant 0.001953125 : f32
    %14 = vector.broadcast %cst_6 : f32 to vector<1x4x1xf32>
    %15 = arith.mulf %13, %14 : vector<1x4x1xf32>
    %cst_7 = arith.constant 9.99999974E-6 : f32
    %16 = vector.broadcast %cst_7 : f32 to vector<1x4x1xf32>
    %17 = arith.addf %15, %16 : vector<1x4x1xf32>
    %18 = math.rsqrt %17 : vector<1x4x1xf32>
    %c0_8 = arith.constant 0 : index
    %c0_9 = arith.constant 0 : index
    %19 = vector.load %arg2[%c0_8, %c0_9] : memref<4x2xf32, #tpu.memory_space<vmem>>, vector<4x2xf32>
    %20 = vector.extract_strided_slice %19 {offsets = [0, 0], sizes = [4, 1], strides = [1, 1]} : vector<4x2xf32> to vector<4x1xf32>
    %21 = vector.extract_strided_slice %19 {offsets = [0, 1], sizes = [4, 1], strides = [1, 1]} : vector<4x2xf32> to vector<4x1xf32>
    %22 = vector.shape_cast %20 : vector<4x1xf32> to vector<1x4x1xf32>
    %23 = arith.mulf %22, %18 : vector<1x4x1xf32>
    %24 = vector.broadcast %23 : vector<1x4x1xf32> to vector<2x4x256xf32>
    %25 = arith.mulf %8, %24 : vector<2x4x256xf32>
    %26 = vector.shape_cast %21 : vector<4x1xf32> to vector<1x4x1xf32>
    %27 = vector.broadcast %26 : vector<1x4x1xf32> to vector<2x4x256xf32>
    %28 = arith.addf %25, %27 : vector<2x4x256xf32>
    %c0_10 = arith.constant 0 : index
    %c0_11 = arith.constant 0 : index
    %c0_12 = arith.constant 0 : index
    %29 = vector.load %arg3[%c0_10, %c0_11, %c0_12] : memref<2x4x256xf32, #tpu.memory_space<vmem>>, vector<2x4x256xf32>
    tpu.vector_store %arg3[%c0_10, %c0_11, %c0_12], %28 {strides = array<i32>} : memref<2x4x256xf32, #tpu.memory_space<vmem>>, vector<2x4x256xf32>,
    %30 = vector.shape_cast %6 : vector<1x4x1xf32> to vector<4x1xf32>
    %31 = vector.shape_cast %15 : vector<1x4x1xf32> to vector<4x1xf32>
    %32 = tpu.concatenate %30, %31 in 1 : vector<4x1xf32>, vector<4x1xf32> -> vector<4x2xf32>
    %c0_13 = arith.constant 0 : index
    %c0_14 = arith.constant 0 : index
    %33 = vector.load %arg4[%c0_13, %c0_14] : memref<4x2xf32, #tpu.memory_space<vmem>>, vector<4x2xf32>
    tpu.vector_store %arg4[%c0_13, %c0_14], %32 {strides = array<i32>} : memref<4x2xf32, #tpu.memory_space<vmem>>, vector<4x2xf32>,
    return
  }
  func.func @transform_0(%arg0: i32) -> (i32, i32, i32) {
    %c0_i32 = arith.constant 0 : i32
    %c0_i32_0 = arith.constant 0 : i32
    %c0_i32_1 = arith.constant 0 : i32
    return %c0_i32, %arg0, %c0_i32_0 : i32, i32, i32
  }
  func.func @transform_1(%arg0: i32) -> (i32, i32) {
    %c0_i32 = arith.constant 0 : i32
    %c0_i32_0 = arith.constant 0 : i32
    return %arg0, %c0_i32 : i32, i32
  }
  func.func @transform_2(%arg0: i32) -> (i32, i32, i32) {
    %c0_i32 = arith.constant 0 : i32
    %c0_i32_0 = arith.constant 0 : i32
    %c0_i32_1 = arith.constant 0 : i32
    return %c0_i32, %arg0, %c0_i32_0 : i32, i32, i32
  }
  func.func @transform_3(%arg0: i32) -> (i32, i32) {
    %c0_i32 = arith.constant 0 : i32
    %c0_i32_0 = arith.constant 0 : i32
    return %arg0, %c0_i32 : i32, i32
  }
}

</mosaic_0001>

<llo_original>
// kernel: tpu_custom_call.1
$region0: #{tpu_custom_call.1}
  #allocation0 [shape = 'u32[]', space=smem, size = 0x4, offset = 0x4, fixed_abs, tag = 'smem constant byte address 0x4 - core index']
  #allocation1 [shape = 'u32[144,128]{1,0:T(1,128)}', space=vmem, size = 0x12000, scoped, tag = 'internal scratch']
  %s0 = inlined_call_operand.hbm [shape: f32[2,4,256], index: 0, kind: input, shape index: {}]
  %s1 = inlined_call_operand.vmem [shape: f32[4,2], index: 1, kind: input, shape index: {}]
  %s2 = inlined_call_operand.hbm [shape: f32[2,4,256], index: 2, kind: output, shape index: {0}]
  %s3 = inlined_call_operand.vmem [shape: f32[4,2], index: 3, kind: output, shape index: {1}]
  %4 = xla_tuple %s2, %s3
  %s5 = sld [smem:[#allocation0]]
  $region30: #{tpu_custom_call.1} parent=0
    _
  %s7 = ssub.s32 1, %s5
  %s8 = scalar_select 0, %s7, %s5
  $region1: #{tpu_custom_call.1} parent=0
    #allocation2 [shape = 'u8[8192]{0}', space=vmem, size = 0x2000, scoped, tag = 'input window, operand 0, single buffered']
    #allocation3 [shape = 's32[1]{0}', space=sflag, size = 0x4, scoped, tag = 'scoped memory for tpu_custom_call.1']
    #allocation4 [shape = 's32[1]{0}', space=sflag, size = 0x4, scoped, tag = 'scoped memory for tpu_custom_call.1']
    #allocation5 [shape = 'u8[8192]{0}', space=vmem, size = 0x2000, scoped, tag = 'output window, operand 0, single buffered']
    %9 = vsyncpa [#allocation3], 0
    %10 = vsyncpa [#allocation4], 0
    // Predicated region
    $region2: #{tpu_custom_call.1} parent=1 // pred_check
      _
    $region3: #{tpu_custom_call.1} parent=1 // pred_check_branch
      %12 = sbr.rel (0) target = $region5
    $region4: #{tpu_custom_call.1} parent=1 // pred_region
      %s14 = ssub.s32 256, 256
      %15 = vsyncadd [#allocation3], %s14
      %s16 = sshll.u32 [#allocation2], 4
      %s17 = int_to_ptr.vmem [resolvable:$true] %s16
      %22 = dma.hbm_to_vmem [thread:$0]  %s0, 256, %s17, [#allocation3], 128, 128, 8
    $region5: #{tpu_custom_call.1} parent=1 // pred_fallthru
      _
    // Predicated region
    $region6: #{tpu_custom_call.1} parent=1 // pred_check
      _
    $region7: #{tpu_custom_call.1} parent=1 // pred_check_branch
      %24 = sbr.rel (0) target = $region9
    $region8: #{tpu_custom_call.1} parent=1 // pred_region
      _
    $region9: #{tpu_custom_call.1} parent=1 // pred_fallthru
      _
    // Predicated region
    $region10: #{tpu_custom_call.1} parent=1 // pred_check
      _
    $region11: #{tpu_custom_call.1} parent=1 // pred_check_branch
      %26 = sbr.rel (0) target = $region13
    $region12: #{tpu_custom_call.1} parent=1 // pred_region
      %27 = dma.done [#allocation3], 256
    $region13: #{tpu_custom_call.1} parent=1 // pred_fallthru
      _
    %v28 = vld [vmem:[#allocation2] sm:$0xff]
    %v29 = vld [vmem:[#allocation2 + $0x8] sm:$0xff]
    %v32 = vcombine.high %v28, %v28
    %v33 = vcombine.high %v29, %v29
    %vm36 = vcmask 1043456
    %v37 = vsel %vm36, %v28, 0.0
    %v38 = vsel %vm36, %v32, 0.0
    %v39 = vadd.f32 %v37, %v38
    %40 = vadd.xlane.f32.xlu0 %v39
    %v41 = vpop.xlane.xlu0 %40
    %v42 = vsel %vm36, %v29, 0.0
    %v43 = vsel %vm36, %v33, 0.0
    %v44 = vadd.f32 %v42, %v43
    %45 = vadd.xlane.f32.xlu0 %v44
    %v46 = vpop.xlane.xlu0 %45
    %v47 = vsel %vm36, %v41, 0.0
    %v48 = vsel %vm36, %v46, 0.0
    %v49 = vadd.f32 %v47, %v48
    %v50 = vmul.f32 %v49, 0.001953125
    %v53 = vunpack.c.l.s4 839922192
    %v54 = vunpack.c.0.s8 %v53
    %v55 = vlaneseq
    %v56 = vshrl.u32 %v55, 7
    %v57 = vsub.s32 %v54, %v56
    %v58 = vrot.slane %v50, %v57
    %v60 = vsub.f32 %v28, %v58
    %v61 = vsub.f32 %v29, %v58
    %v62 = vmul.f32 %v60, %v60
    %v63 = vmul.f32 %v61, %v61
    %v66 = vcombine.high %v62, %v62
    %v67 = vcombine.high %v63, %v63
    %v70 = vsel %vm36, %v62, 0.0
    %v71 = vsel %vm36, %v66, 0.0
    %v72 = vadd.f32 %v70, %v71
    %73 = vadd.xlane.f32.xlu0 %v72
    %v74 = vpop.xlane.xlu0 %73
    %v75 = vsel %vm36, %v63, 0.0
    %v76 = vsel %vm36, %v67, 0.0
    %v77 = vadd.f32 %v75, %v76
    %78 = vadd.xlane.f32.xlu0 %v77
    %v79 = vpop.xlane.xlu0 %78
    %v80 = vsel %vm36, %v74, 0.0
    %v81 = vsel %vm36, %v79, 0.0
    %v82 = vadd.f32 %v80, %v81
    %v83 = vmul.f32 %v82, 0.001953125
    %v84 = vadd.f32 %v83, 1e-05
    %v85 = vrsqrt.pop %v84
    %v86 = vld [vmem:[%s1] sm:$0xf]
    %v87 = vmul.f32 %v86, %v85
    %89 = vset.pattern.permute.xlu0 0
    %90 = vperm.xlu0 %89, %v87
    %v91 = vpop.permute.xlu0 %90
    %v93 = vunpack.c.l.s4 839922192
    %v94 = vunpack.c.0.s8 %v93
    %v95 = vlaneseq
    %v96 = vshrl.u32 %v95, 7
    %v97 = vsub.s32 %v94, %v96
    %v98 = vrot.slane %v91, %v97
    %v100 = vmul.f32 %v60, %v98
    %v101 = vmul.f32 %v61, %v98
    %103 = vset.pattern.permute.xlu0 1
    %104 = vperm.xlu0 %103, %v86
    %v105 = vpop.permute.xlu0 %104
    %v107 = vunpack.c.l.s4 839922192
    %v108 = vunpack.c.0.s8 %v107
    %v109 = vlaneseq
    %v110 = vshrl.u32 %v109, 7
    %v111 = vsub.s32 %v108, %v110
    %v112 = vrot.slane %v105, %v111
    %v114 = vadd.f32 %v100, %v112
    %v115 = vadd.f32 %v101, %v112
    %116 = vst [vmem:[#allocation5] sm:$0xff] %v114
    %117 = vst [vmem:[#allocation5 + $0x8] sm:$0xff] %v115
    %vm118 = vcmask 7168
    %v119 = vsel %vm118, %v50, %v83
    %vm120 = vcmask 11264
    %121 = vst.msk [vmem:[%s3] sm:$0xf] %vm120, %v119
    // Predicated region
    $region14: #{tpu_custom_call.1} parent=1 // pred_check
      _
    $region15: #{tpu_custom_call.1} parent=1 // pred_check_branch
      %123 = sbr.rel (0) target = $region17
    $region16: #{tpu_custom_call.1} parent=1 // pred_region
      %s125 = ssub.s32 256, 256
      %126 = vsyncadd [#allocation4], %s125
      %s127 = sshll.u32 [#allocation5], 4
      %s128 = int_to_ptr.vmem [resolvable:$true] %s127
      %133 = dma.vmem_to_hbm [thread:$0]  %s128, 256, %s2, [#allocation4], 128, 128, 8
    $region17: #{tpu_custom_call.1} parent=1 // pred_fallthru
      _
    // Predicated region
    $region18: #{tpu_custom_call.1} parent=1 // pred_check
      _
    $region19: #{tpu_custom_call.1} parent=1 // pred_check_branch
      %135 = sbr.rel (0) target = $region21
    $region20: #{tpu_custom_call.1} parent=1 // pred_region
      _
    $region21: #{tpu_custom_call.1} parent=1 // pred_fallthru
      _
    // Predicated region
    $region22: #{tpu_custom_call.1} parent=1 // pred_check
      _
    $region23: #{tpu_custom_call.1} parent=1 // pred_check_branch
      %137 = sbr.rel (0) target = $region25
    $region24: #{tpu_custom_call.1} parent=1 // pred_region
      %138 = dma.done [#allocation4], 256
    $region25: #{tpu_custom_call.1} parent=1 // pred_fallthru
      _
    // Predicated region
    $region26: #{tpu_custom_call.1} parent=1 // pred_check
      _
    $region27: #{tpu_custom_call.1} parent=1 // pred_check_branch
      %140 = sbr.rel (0) target = $region29
    $region28: #{tpu_custom_call.1} parent=1 // pred_region
      _
    $region29: #{tpu_custom_call.1} parent=1 // pred_fallthru
      _
    %141 = vsyncpa [#allocation3], 1
    %142 = vsyncpa [#allocation4], 1

</llo_original>
